<compile_context>
chip_gen: v7x
topology: tpu7x:2x2x1
jax: 0.10.0
libtpu: 0.0.40
codegen_flags: <defaults>
</compile_context>

<pallas_src>
import jax
import jax.numpy as jnp
from jax.experimental import pallas as pl
from jax.experimental.pallas import tpu as pltpu


def _round_up(x, m):
    return (x + m - 1) // m * m


def _pick_batch_tile(batch, batch_tile):
    """Batch tile: multiple of 8, >=2 grid steps when possible (v7x megacore)."""
    b8 = _round_up(batch, 8)
    if b8 >= 2 * batch_tile:
        return batch_tile                 # large batch: big tiles, many steps
    if b8 >= 16:
        return _round_up(b8 // 2, 8)      # at least 2 grid steps
    return max(b8, 8)                     # tiny batch: single step


# ---------------------------------------------------------------------------
# Pallas kernel: one-hot gathers, genre_fc+relu, fc1+relu, fc2+relu, fc3
# ---------------------------------------------------------------------------
def hybrid_recsys_kernel(idx_ref, genre_ref,
                         u_tab_ref, m_tab_ref,
                         wg_ref, bg_ref,
                         w1u_ref, w1m_ref, w1g_ref, b1_ref,
                         w2_ref, b2_ref,
                         w3_ref, b3_ref,
                         out_ref):
    f32 = jnp.float32
    bf16 = jnp.bfloat16

    idx = idx_ref[...]                      # (TB, 2) int32: col0=user, col1=movie
    tb = idx.shape[0]
    nu = u_tab_ref.shape[0]
    nm = m_tab_ref.shape[0]

    # Embedding gathers fused in-kernel: tables are VMEM-resident bf16, the
    # one-hot {0,1} MXU dot is an exact row select (f32 accumulation).
    oh_u = (jax.lax.broadcasted_iota(jnp.int32, (tb, nu), 1)
            == idx[:, 0:1]).astype(bf16)                       # (TB, NU)
    oh_m = (jax.lax.broadcasted_iota(jnp.int32, (tb, nm), 1)
            == idx[:, 1:2]).astype(bf16)                       # (TB, NM)
    user_e = jnp.dot(oh_u, u_tab_ref[...],
                     preferred_element_type=f32).astype(bf16)   # (TB, E)
    movie_e = jnp.dot(oh_m, m_tab_ref[...],
                      preferred_element_type=f32).astype(bf16)  # (TB, E)

    # genre_emb = relu(genre @ Wg^T + bg); genre arrives natural-width f32 and
    # is cast to bf16 only here (exact for a 0/1 multi-hot vector).
    g = jnp.dot(genre_ref[...].astype(bf16), wg_ref[...],
                preferred_element_type=f32) + bg_ref[...]
    g = jnp.maximum(g, 0.0)

    # fc1: concat([user_emb, movie_emb, genre_emb], -1) @ W1^T == 3 summed dots
    h1 = (jnp.dot(user_e, w1u_ref[...], preferred_element_type=f32)
          + jnp.dot(movie_e, w1m_ref[...], preferred_element_type=f32)
          + jnp.dot(g.astype(bf16), w1g_ref[...], preferred_element_type=f32)
          + b1_ref[...])
    h1 = jnp.maximum(h1, 0.0)

    # fc2 + relu
    h2 = jnp.dot(h1.astype(bf16), w2_ref[...],
                 preferred_element_type=f32) + b2_ref[...]
    h2 = jnp.maximum(h2, 0.0)

    # fc3 (out_features = 1): broadcast-mul + lane reduction -> (TB, 1) f32.
    # The HBM output stream is 4 B/row instead of a 128-lane padded slab.
    out_ref[...] = jnp.sum(h2 * w3_ref[...], axis=-1, keepdims=True) + b3_ref[...]


# ---------------------------------------------------------------------------
# Wrapper: weight layout prep + gridded pallas_call
# ---------------------------------------------------------------------------
def hybrid_recsys_forward(params, user_idx, movie_idx, genre_vector, *,
                          batch_tile=2048):
    u_tab = params["user_embedding"]            # (NU, E) f32
    m_tab = params["movie_embedding"]           # (NM, E) f32
    NU, E = u_tab.shape
    NM = m_tab.shape[0]
    G = genre_vector.shape[1]
    H1 = params["w1"].shape[0]                  # torch fc1.weight: (64, 3E)
    H2 = params["w2"].shape[0]                  # torch fc2.weight: (32, 64)
    B = user_idx.shape[0]

    TB = _pick_batch_tile(B, batch_tile)
    B_pad = _round_up(B, TB)
    nb = B_pad // TB

    # --- streamed per-row inputs (only pad the batch dim when needed) --------
    idx = jnp.stack([user_idx.astype(jnp.int32),
                     movie_idx.astype(jnp.int32)], axis=1)      # (B, 2)
    genre = genre_vector.astype(jnp.float32)                    # (B, G) natural width
    if B_pad != B:
        idx = jnp.pad(idx, ((0, B_pad - B), (0, 0)))            # idx 0 is valid
        genre = jnp.pad(genre, ((0, B_pad - B), (0, 0)))

    # --- VMEM-resident parameters (bf16 for the MXU, f32 biases) -------------
    u_tab_b = u_tab.astype(jnp.bfloat16)                        # (NU, E)
    m_tab_b = m_tab.astype(jnp.bfloat16)                        # (NM, E)

    wg = params["wg"].T.astype(jnp.bfloat16)                    # (G, E)
    bg = params["bg"].reshape(1, E).astype(jnp.float32)

    w1t = params["w1"].T                                        # (3E, H1)
    w1u = w1t[0 * E:1 * E].astype(jnp.bfloat16)                 # (E, H1)
    w1m = w1t[1 * E:2 * E].astype(jnp.bfloat16)
    w1g = w1t[2 * E:3 * E].astype(jnp.bfloat16)
    b1 = params["b1"].reshape(1, H1).astype(jnp.float32)

    w2 = params["w2"].T.astype(jnp.bfloat16)                    # (H1, H2)
    b2 = params["b2"].reshape(1, H2).astype(jnp.float32)

    w3 = params["w3"].astype(jnp.float32)                       # (1, H2), VPU mul
    b3 = params["b3"].reshape(1, 1).astype(jnp.float32)

    def stream(cols):
        # Batch-streamed block; last dim equals the full array extent, so no
        # 128-lane padding is required (Mosaic handles the narrow lane width).
        return pl.BlockSpec((TB, cols), lambda i: (i, 0))

    def resident(shape):
        # Same block every grid step -> stays resident in VMEM.
        return pl.BlockSpec(shape, lambda i: (0, 0))

    out = pl.pallas_call(
        hybrid_recsys_kernel,
        out_shape=jax.ShapeDtypeStruct((B_pad, 1), jnp.float32),
        grid_spec=pltpu.PrefetchScalarGridSpec(
            num_scalar_prefetch=0,
            grid=(nb,),
            in_specs=[
                stream(2),                       # packed [user_idx, movie_idx]
                stream(G),                       # genre multi-hot (natural width)
                resident((NU, E)),               # user embedding table
                resident((NM, E)),               # movie embedding table
                resident((G, E)), resident((1, E)),                       # genre_fc
                resident((E, H1)), resident((E, H1)), resident((E, H1)),  # fc1 u/m/g
                resident((1, H1)),                                        # fc1 bias
                resident((H1, H2)), resident((1, H2)),                    # fc2
                resident((1, H2)), resident((1, 1)),                      # fc3
            ],
            out_specs=stream(1),
        ),
        compiler_params=pltpu.CompilerParams(
            dimension_semantics=("parallel",),       # batch steps are independent
            vmem_limit_bytes=32 * 1024 * 1024,       # headroom for TB=2048..4096 on v5e
        ),
    )(idx, genre, u_tab_b, m_tab_b, wg, bg, w1u, w1m, w1g, b1, w2, b2, w3, b3)

    # torch `.squeeze()` on the (B, 1) rating
    return out[:B, 0]


# ---------------------------------------------------------------------------
# Pure-JAX f32 reference (mirrors the PyTorch forward exactly)
# ---------------------------------------------------------------------------
def hybrid_recsys_reference(params, user_idx, movie_idx, genre_vector):
    u = params["user_embedding"][user_idx]
    m = params["movie_embedding"][movie_idx]
    g = jax.nn.relu(genre_vector @ params["wg"].T + params["bg"])
    x = jnp.concatenate([u, m, g], axis=1)          # [user, movie, genre_emb]
    x = jax.nn.relu(x @ params["w1"].T + params["b1"])
    x = jax.nn.relu(x @ params["w2"].T + params["b2"])
    return (x @ params["w3"].T + params["b3"]).squeeze()


# ---------------------------------------------------------------------------
# Deterministic parameter init (PyTorch-shaped weights, i.e. (out, in))
# ---------------------------------------------------------------------------
def init_params(key, num_users, num_movies, num_genres, embedding_dim):
    ks = jax.random.split(key, 10)

    def linear(kw, kb, fan_in, fan_out):
        # nn.Linear default: U(-1/sqrt(fan_in), 1/sqrt(fan_in)), weight (out, in)
        bound = 1.0 / (fan_in ** 0.5)
        w = jax.random.uniform(kw, (fan_out, fan_in), jnp.float32, -bound, bound)
        b = jax.random.uniform(kb, (fan_out,), jnp.float32, -bound, bound)
        return w, b

    wg, bg = linear(ks[2], ks[3], num_genres, embedding_dim)
    w1, b1 = linear(ks[4], ks[5], 3 * embedding_dim, 64)
    w2, b2 = linear(ks[6], ks[7], 64, 32)
    w3, b3 = linear(ks[8], ks[9], 32, 1)

    return {
        # nn.Embedding default: N(0, 1)
        "user_embedding": jax.random.normal(ks[0], (num_users, embedding_dim),
                                            jnp.float32),
        "movie_embedding": jax.random.normal(ks[1], (num_movies, embedding_dim),
                                             jnp.float32),
        "wg": wg, "bg": bg,
        "w1": w1, "b1": b1,
        "w2": w2, "b2": b2,
        "w3": w3, "b3": b3,
    }


if __name__ == "__main__":
    num_users, num_movies, num_genres, embedding_dim = 16, 32, 18, 32
    batch = 8

    key = jax.random.PRNGKey(0)
    kp, ku, km, kg = jax.random.split(key, 4)

    params = init_params(kp, num_users, num_movies, num_genres, embedding_dim)

    user_idx = jax.random.randint(ku, (batch,), 0, num_users, dtype=jnp.int32)
    movie_idx = jax.random.randint(km, (batch,), 0, num_movies, dtype=jnp.int32)
    genre_vector = (jax.random.uniform(kg, (batch, num_genres)) > 0.7).astype(
        jnp.float32)  # multi-hot genre vector

    fwd = jax.jit(lambda p, u, m, g: hybrid_recsys_forward(p, u, m, g))
    rating = fwd(params, user_idx, movie_idx, genre_vector)
    jax.block_until_ready(rating)

    assert rating.shape == (batch,), rating.shape
    assert bool(jnp.all(jnp.isfinite(rating)))

    # bf16 MXU path vs f32 reference: expect ~1e-2-level differences.
    ref = hybrid_recsys_reference(params, user_idx, movie_idx, genre_vector)
    assert bool(jnp.allclose(rating, ref, atol=1e-1, rtol=5e-2)), (
        jnp.max(jnp.abs(rating - ref)))

    print("KERNEL_OK")
</pallas_src>

<mosaic_0001>
module attributes {stable_mosaic.version = 11 : i64} {
  func.func @hybrid_recsys_kernel(%arg0: i32, %arg1: memref<8x2xi32, #tpu.memory_space<vmem>>, %arg2: memref<8x18xf32, #tpu.memory_space<vmem>>, %arg3: memref<16x32xbf16, #tpu.memory_space<vmem>>, %arg4: memref<32x32xbf16, #tpu.memory_space<vmem>>, %arg5: memref<18x32xbf16, #tpu.memory_space<vmem>>, %arg6: memref<1x32xf32, #tpu.memory_space<vmem>>, %arg7: memref<32x64xbf16, #tpu.memory_space<vmem>>, %arg8: memref<32x64xbf16, #tpu.memory_space<vmem>>, %arg9: memref<32x64xbf16, #tpu.memory_space<vmem>>, %arg10: memref<1x64xf32, #tpu.memory_space<vmem>>, %arg11: memref<64x32xbf16, #tpu.memory_space<vmem>>, %arg12: memref<1x32xf32, #tpu.memory_space<vmem>>, %arg13: memref<1x32xf32, #tpu.memory_space<vmem>>, %arg14: memref<1x1xf32, #tpu.memory_space<vmem>>, %arg15: memref<8x1xf32, #tpu.memory_space<vmem>>) attributes {dimension_semantics = [#tpu.dimension_semantics<parallel>], iteration_bounds = array<i64: 1>, scalar_prefetch = 0 : i64, scratch_operands = 0 : i64, tpu.core_type = #tpu.core_type<tc>, window_params = [{transform_indices = @transform_0, window_bounds = array<i64: 8, 2>}, {transform_indices = @transform_1, window_bounds = array<i64: 8, 18>}, {pipeline_mode = #tpu.pipeline_mode<synchronous>, transform_indices = @transform_2, window_bounds = array<i64: 16, 32>}, {pipeline_mode = #tpu.pipeline_mode<synchronous>, transform_indices = @transform_3, window_bounds = array<i64: 32, 32>}, {pipeline_mode = #tpu.pipeline_mode<synchronous>, transform_indices = @transform_4, window_bounds = array<i64: 18, 32>}, {pipeline_mode = #tpu.pipeline_mode<synchronous>, transform_indices = @transform_5, window_bounds = array<i64: 1, 32>}, {pipeline_mode = #tpu.pipeline_mode<synchronous>, transform_indices = @transform_6, window_bounds = array<i64: 32, 64>}, {pipeline_mode = #tpu.pipeline_mode<synchronous>, transform_indices = @transform_7, window_bounds = array<i64: 32, 64>}, {pipeline_mode = #tpu.pipeline_mode<synchronous>, transform_indices = @transform_8, window_bounds = array<i64: 32, 64>}, {pipeline_mode = #tpu.pipeline_mode<synchronous>, transform_indices = @transform_9, window_bounds = array<i64: 1, 64>}, {pipeline_mode = #tpu.pipeline_mode<synchronous>, transform_indices = @transform_10, window_bounds = array<i64: 64, 32>}, {pipeline_mode = #tpu.pipeline_mode<synchronous>, transform_indices = @transform_11, window_bounds = array<i64: 1, 32>}, {pipeline_mode = #tpu.pipeline_mode<synchronous>, transform_indices = @transform_12, window_bounds = array<i64: 1, 32>}, {pipeline_mode = #tpu.pipeline_mode<synchronous>, transform_indices = @transform_13, window_bounds = array<i64: 1, 1>}, {transform_indices = @transform_14, window_bounds = array<i64: 8, 1>}]} {
    %c0 = arith.constant 0 : index
    %c0_0 = arith.constant 0 : index
    %0 = vector.load %arg1[%c0, %c0_0] : memref<8x2xi32, #tpu.memory_space<vmem>>, vector<8x2xi32>
    %1 = tpu.iota {dimensions = array<i32: 1>} : vector<8x16xi32>
    %2 = vector.extract_strided_slice %0 {offsets = [0, 0], sizes = [8, 1], strides = [1, 1]} : vector<8x2xi32> to vector<8x1xi32>
    %3 = vector.broadcast %2 : vector<8x1xi32> to vector<8x16xi32>
    %4 = arith.cmpi eq, %1, %3 : vector<8x16xi32>
    %5 = arith.extui %4 : vector<8x16xi1> to vector<8x16xi32>
    %6 = arith.sitofp %5 : vector<8x16xi32> to vector<8x16xf32>
    %7 = arith.truncf %6 : vector<8x16xf32> to vector<8x16xbf16>
    %8 = tpu.iota {dimensions = array<i32: 1>} : vector<8x32xi32>
    %9 = vector.extract_strided_slice %0 {offsets = [0, 1], sizes = [8, 1], strides = [1, 1]} : vector<8x2xi32> to vector<8x1xi32>
    %10 = vector.broadcast %9 : vector<8x1xi32> to vector<8x32xi32>
    %11 = arith.cmpi eq, %8, %10 : vector<8x32xi32>
    %12 = arith.extui %11 : vector<8x32xi1> to vector<8x32xi32>
    %13 = arith.sitofp %12 : vector<8x32xi32> to vector<8x32xf32>
    %14 = arith.truncf %13 : vector<8x32xf32> to vector<8x32xbf16>
    %c0_1 = arith.constant 0 : index
    %c0_2 = arith.constant 0 : index
    %15 = vector.load %arg3[%c0_1, %c0_2] : memref<16x32xbf16, #tpu.memory_space<vmem>>, vector<16x32xbf16>
    %cst = arith.constant dense<0.000000e+00> : vector<8x32xf32>
    %16 = tpu.matmul %7, %15, %cst {dimension_numbers = #tpu.dot_dimension_numbers<[1], [0], [0], [1], [0, 0, 1, 1], [], []>} : vector<8x16xbf16>, vector<16x32xbf16>, vector<8x32xf32> -> vector<8x32xf32>
    %17 = arith.truncf %16 : vector<8x32xf32> to vector<8x32xbf16>
    %c0_3 = arith.constant 0 : index
    %c0_4 = arith.constant 0 : index
    %18 = vector.load %arg4[%c0_3, %c0_4] : memref<32x32xbf16, #tpu.memory_space<vmem>>, vector<32x32xbf16>
    %cst_5 = arith.constant dense<0.000000e+00> : vector<8x32xf32>
    %19 = tpu.matmul %14, %18, %cst_5 {dimension_numbers = #tpu.dot_dimension_numbers<[1], [0], [0], [1], [0, 0, 1, 1], [], []>} : vector<8x32xbf16>, vector<32x32xbf16>, vector<8x32xf32> -> vector<8x32xf32>
    %20 = arith.truncf %19 : vector<8x32xf32> to vector<8x32xbf16>
    %c0_6 = arith.constant 0 : index
    %c0_7 = arith.constant 0 : index
    %21 = vector.load %arg2[%c0_6, %c0_7] : memref<8x18xf32, #tpu.memory_space<vmem>>, vector<8x18xf32>
    %22 = arith.truncf %21 : vector<8x18xf32> to vector<8x18xbf16>
    %c0_8 = arith.constant 0 : index
    %c0_9 = arith.constant 0 : index
    %23 = vector.load %arg5[%c0_8, %c0_9] : memref<18x32xbf16, #tpu.memory_space<vmem>>, vector<18x32xbf16>
    %cst_10 = arith.constant dense<0.000000e+00> : vector<8x32xf32>
    %24 = tpu.matmul %22, %23, %cst_10 {dimension_numbers = #tpu.dot_dimension_numbers<[1], [0], [0], [1], [0, 0, 1, 1], [], []>} : vector<8x18xbf16>, vector<18x32xbf16>, vector<8x32xf32> -> vector<8x32xf32>
    %c0_11 = arith.constant 0 : index
    %c0_12 = arith.constant 0 : index
    %25 = vector.load %arg6[%c0_11, %c0_12] : memref<1x32xf32, #tpu.memory_space<vmem>>, vector<1x32xf32>
    %26 = vector.broadcast %25 : vector<1x32xf32> to vector<8x32xf32>
    %27 = arith.addf %24, %26 : vector<8x32xf32>
    %cst_13 = arith.constant 0.000000e+00 : f32
    %28 = vector.broadcast %cst_13 : f32 to vector<8x32xf32>
    %29 = arith.maximumf %27, %28 : vector<8x32xf32>
    %c0_14 = arith.constant 0 : index
    %c0_15 = arith.constant 0 : index
    %30 = vector.load %arg7[%c0_14, %c0_15] : memref<32x64xbf16, #tpu.memory_space<vmem>>, vector<32x64xbf16>
    %cst_16 = arith.constant dense<0.000000e+00> : vector<8x64xf32>
    %31 = tpu.matmul %17, %30, %cst_16 {dimension_numbers = #tpu.dot_dimension_numbers<[1], [0], [0], [1], [0, 0, 1, 1], [], []>} : vector<8x32xbf16>, vector<32x64xbf16>, vector<8x64xf32> -> vector<8x64xf32>
    %c0_17 = arith.constant 0 : index
    %c0_18 = arith.constant 0 : index
    %32 = vector.load %arg8[%c0_17, %c0_18] : memref<32x64xbf16, #tpu.memory_space<vmem>>, vector<32x64xbf16>
    %cst_19 = arith.constant dense<0.000000e+00> : vector<8x64xf32>
    %33 = tpu.matmul %20, %32, %cst_19 {dimension_numbers = #tpu.dot_dimension_numbers<[1], [0], [0], [1], [0, 0, 1, 1], [], []>} : vector<8x32xbf16>, vector<32x64xbf16>, vector<8x64xf32> -> vector<8x64xf32>
    %34 = arith.addf %31, %33 : vector<8x64xf32>
    %35 = arith.truncf %29 : vector<8x32xf32> to vector<8x32xbf16>
    %c0_20 = arith.constant 0 : index
    %c0_21 = arith.constant 0 : index
    %36 = vector.load %arg9[%c0_20, %c0_21] : memref<32x64xbf16, #tpu.memory_space<vmem>>, vector<32x64xbf16>
    %cst_22 = arith.constant dense<0.000000e+00> : vector<8x64xf32>
    %37 = tpu.matmul %35, %36, %cst_22 {dimension_numbers = #tpu.dot_dimension_numbers<[1], [0], [0], [1], [0, 0, 1, 1], [], []>} : vector<8x32xbf16>, vector<32x64xbf16>, vector<8x64xf32> -> vector<8x64xf32>
    %38 = arith.addf %34, %37 : vector<8x64xf32>
    %c0_23 = arith.constant 0 : index
    %c0_24 = arith.constant 0 : index
    %39 = vector.load %arg10[%c0_23, %c0_24] : memref<1x64xf32, #tpu.memory_space<vmem>>, vector<1x64xf32>
    %40 = vector.broadcast %39 : vector<1x64xf32> to vector<8x64xf32>
    %41 = arith.addf %38, %40 : vector<8x64xf32>
    %cst_25 = arith.constant 0.000000e+00 : f32
    %42 = vector.broadcast %cst_25 : f32 to vector<8x64xf32>
    %43 = arith.maximumf %41, %42 : vector<8x64xf32>
    %44 = arith.truncf %43 : vector<8x64xf32> to vector<8x64xbf16>
    %c0_26 = arith.constant 0 : index
    %c0_27 = arith.constant 0 : index
    %45 = vector.load %arg11[%c0_26, %c0_27] : memref<64x32xbf16, #tpu.memory_space<vmem>>, vector<64x32xbf16>
    %cst_28 = arith.constant dense<0.000000e+00> : vector<8x32xf32>
    %46 = tpu.matmul %44, %45, %cst_28 {dimension_numbers = #tpu.dot_dimension_numbers<[1], [0], [0], [1], [0, 0, 1, 1], [], []>} : vector<8x64xbf16>, vector<64x32xbf16>, vector<8x32xf32> -> vector<8x32xf32>
    %c0_29 = arith.constant 0 : index
    %c0_30 = arith.constant 0 : index
    %47 = vector.load %arg12[%c0_29, %c0_30] : memref<1x32xf32, #tpu.memory_space<vmem>>, vector<1x32xf32>
    %48 = vector.broadcast %47 : vector<1x32xf32> to vector<8x32xf32>
    %49 = arith.addf %46, %48 : vector<8x32xf32>
    %cst_31 = arith.constant 0.000000e+00 : f32
    %50 = vector.broadcast %cst_31 : f32 to vector<8x32xf32>
    %51 = arith.maximumf %49, %50 : vector<8x32xf32>
    %c0_32 = arith.constant 0 : index
    %c0_33 = arith.constant 0 : index
    %52 = vector.load %arg13[%c0_32, %c0_33] : memref<1x32xf32, #tpu.memory_space<vmem>>, vector<1x32xf32>
    %53 = vector.broadcast %52 : vector<1x32xf32> to vector<8x32xf32>
    %54 = arith.mulf %51, %53 : vector<8x32xf32>
    %cst_34 = arith.constant dense<0.000000e+00> : vector<8xf32>
    %55 = vector.multi_reduction <add>, %54, %cst_34 [1] : vector<8x32xf32> to vector<8xf32>
    %56 = vector.shape_cast %55 : vector<8xf32> to vector<8x1xf32>
    %c0_35 = arith.constant 0 : index
    %c0_36 = arith.constant 0 : index
    %57 = vector.load %arg14[%c0_35, %c0_36] : memref<1x1xf32, #tpu.memory_space<vmem>>, vector<1x1xf32>
    %58 = vector.broadcast %57 : vector<1x1xf32> to vector<8x1xf32>
    %59 = arith.addf %56, %58 : vector<8x1xf32>
    %c0_37 = arith.constant 0 : index
    %c0_38 = arith.constant 0 : index
    %60 = vector.load %arg15[%c0_37, %c0_38] : memref<8x1xf32, #tpu.memory_space<vmem>>, vector<8x1xf32>
    tpu.vector_store %arg15[%c0_37, %c0_38], %59 {strides = array<i32>} : memref<8x1xf32, #tpu.memory_space<vmem>>, vector<8x1xf32>,
    return
  }
  func.func @transform_0(%arg0: i32) -> (i32, i32) {
    %c0_i32 = arith.constant 0 : i32
    %c0_i32_0 = arith.constant 0 : i32
    return %arg0, %c0_i32 : i32, i32
  }
  func.func @transform_1(%arg0: i32) -> (i32, i32) {
    %c0_i32 = arith.constant 0 : i32
    %c0_i32_0 = arith.constant 0 : i32
    return %arg0, %c0_i32 : i32, i32
  }
  func.func @transform_2(%arg0: i32) -> (i32, i32) {
    %c0_i32 = arith.constant 0 : i32
    %c0_i32_0 = arith.constant 0 : i32
    %c0_i32_1 = arith.constant 0 : i32
    return %c0_i32, %c0_i32_0 : i32, i32
  }
  func.func @transform_3(%arg0: i32) -> (i32, i32) {
    %c0_i32 = arith.constant 0 : i32
    %c0_i32_0 = arith.constant 0 : i32
    %c0_i32_1 = arith.constant 0 : i32
    return %c0_i32, %c0_i32_0 : i32, i32
  }
  func.func @transform_4(%arg0: i32) -> (i32, i32) {
    %c0_i32 = arith.constant 0 : i32
    %c0_i32_0 = arith.constant 0 : i32
    %c0_i32_1 = arith.constant 0 : i32
    return %c0_i32, %c0_i32_0 : i32, i32
  }
  func.func @transform_5(%arg0: i32) -> (i32, i32) {
    %c0_i32 = arith.constant 0 : i32
    %c0_i32_0 = arith.constant 0 : i32
    %c0_i32_1 = arith.constant 0 : i32
    return %c0_i32, %c0_i32_0 : i32, i32
  }
  func.func @transform_6(%arg0: i32) -> (i32, i32) {
    %c0_i32 = arith.constant 0 : i32
    %c0_i32_0 = arith.constant 0 : i32
    %c0_i32_1 = arith.constant 0 : i32
    return %c0_i32, %c0_i32_0 : i32, i32
  }
  func.func @transform_7(%arg0: i32) -> (i32, i32) {
    %c0_i32 = arith.constant 0 : i32
    %c0_i32_0 = arith.constant 0 : i32
    %c0_i32_1 = arith.constant 0 : i32
    return %c0_i32, %c0_i32_0 : i32, i32
  }
  func.func @transform_8(%arg0: i32) -> (i32, i32) {
    %c0_i32 = arith.constant 0 : i32
    %c0_i32_0 = arith.constant 0 : i32
    %c0_i32_1 = arith.constant 0 : i32
    return %c0_i32, %c0_i32_0 : i32, i32
  }
  func.func @transform_9(%arg0: i32) -> (i32, i32) {
    %c0_i32 = arith.constant 0 : i32
    %c0_i32_0 = arith.constant 0 : i32
    %c0_i32_1 = arith.constant 0 : i32
    return %c0_i32, %c0_i32_0 : i32, i32
  }
  func.func @transform_10(%arg0: i32) -> (i32, i32) {
    %c0_i32 = arith.constant 0 : i32
    %c0_i32_0 = arith.constant 0 : i32
    %c0_i32_1 = arith.constant 0 : i32
    return %c0_i32, %c0_i32_0 : i32, i32
  }
  func.func @transform_11(%arg0: i32) -> (i32, i32) {
    %c0_i32 = arith.constant 0 : i32
    %c0_i32_0 = arith.constant 0 : i32
    %c0_i32_1 = arith.constant 0 : i32
    return %c0_i32, %c0_i32_0 : i32, i32
  }
  func.func @transform_12(%arg0: i32) -> (i32, i32) {
    %c0_i32 = arith.constant 0 : i32
    %c0_i32_0 = arith.constant 0 : i32
    %c0_i32_1 = arith.constant 0 : i32
    return %c0_i32, %c0_i32_0 : i32, i32
  }
  func.func @transform_13(%arg0: i32) -> (i32, i32) {
    %c0_i32 = arith.constant 0 : i32
    %c0_i32_0 = arith.constant 0 : i32
    %c0_i32_1 = arith.constant 0 : i32
    return %c0_i32, %c0_i32_0 : i32, i32
  }
  func.func @transform_14(%arg0: i32) -> (i32, i32) {
    %c0_i32 = arith.constant 0 : i32
    %c0_i32_0 = arith.constant 0 : i32
    return %arg0, %c0_i32 : i32, i32
  }
}

</mosaic_0001>

<llo_original>
// kernel: _lambda_.1
$region0: #{_lambda_.1}
  #allocation0 [shape = 'u32[]', space=smem, size = 0x4, offset = 0x4, fixed_abs, tag = 'smem constant byte address 0x4 - core index']
  #allocation1 [shape = 'u32[144,128]{1,0:T(1,128)}', space=vmem, size = 0x12000, scoped, tag = 'internal scratch']
  #allocation2 [shape = 'f32[1,1]{1,0:T(1,128)S(1)}', space=vmem, size = 0x200, scoped, tag = 'scoped memory for _lambda_.1']
  %s0 = inlined_call_operand.vmem [shape: s32[8,2], index: 0, kind: input, shape index: {}]
  %s1 = inlined_call_operand.vmem [shape: f32[8,18], index: 1, kind: input, shape index: {}]
  %s2 = inlined_call_operand.vmem [shape: bf16[16,32], index: 2, kind: input, shape index: {}]
  %s3 = inlined_call_operand.vmem [shape: bf16[32,32], index: 3, kind: input, shape index: {}]
  %s4 = inlined_call_operand.vmem [shape: bf16[18,32], index: 4, kind: input, shape index: {}]
  %s5 = inlined_call_operand.vmem [shape: f32[1,32], index: 5, kind: input, shape index: {}]
  %s6 = inlined_call_operand.vmem [shape: bf16[32,64], index: 6, kind: input, shape index: {}]
  %s7 = inlined_call_operand.vmem [shape: bf16[32,64], index: 7, kind: input, shape index: {}]
  %s8 = inlined_call_operand.vmem [shape: bf16[32,64], index: 8, kind: input, shape index: {}]
  %s9 = inlined_call_operand.vmem [shape: f32[1,64], index: 9, kind: input, shape index: {}]
  %s10 = inlined_call_operand.vmem [shape: bf16[64,32], index: 10, kind: input, shape index: {}]
  %s11 = inlined_call_operand.vmem [shape: f32[1,32], index: 11, kind: input, shape index: {}]
  %s12 = inlined_call_operand.vmem [shape: f32[1,32], index: 12, kind: input, shape index: {}]
  %s13 = inlined_call_operand.<no memory space> [shape: f32[1,1], index: 13, kind: input, shape index: {}]
  %s14 = inlined_call_operand.vmem [shape: f32[8,1], index: 14, kind: output, shape index: {}]
  %s15 = sld [smem:[#allocation0]]
  $region66: #{_lambda_.1} parent=0
    _
  %s17 = ssub.s32 1, %s15
  %s18 = scalar_select 0, %s17, %s15
  %v19 = vstv %s13
  %20 = vst [vmem:[#allocation2] sm:$0x1] %v19
  // Predicated region
  $region2: #{_lambda_.1} parent=0 // pred_check
    _
  $region3: #{_lambda_.1} parent=0 // pred_check_branch
    %22 = sbr.rel (0) target = $region5
  $region4: #{_lambda_.1} parent=0 // pred_region
    _
  $region5: #{_lambda_.1} parent=0 // pred_fallthru
    _
  // Predicated region
  $region6: #{_lambda_.1} parent=0 // pred_check
    _
  $region7: #{_lambda_.1} parent=0 // pred_check_branch
    %24 = sbr.rel (0) target = $region9
  $region8: #{_lambda_.1} parent=0 // pred_region
    _
  $region9: #{_lambda_.1} parent=0 // pred_fallthru
    _
  // Predicated region
  $region10: #{_lambda_.1} parent=0 // pred_check
    _
  $region11: #{_lambda_.1} parent=0 // pred_check_branch
    %26 = sbr.rel (0) target = $region13
  $region12: #{_lambda_.1} parent=0 // pred_region
    _
  $region13: #{_lambda_.1} parent=0 // pred_fallthru
    _
  // Predicated region
  $region14: #{_lambda_.1} parent=0 // pred_check
    _
  $region15: #{_lambda_.1} parent=0 // pred_check_branch
    %28 = sbr.rel (0) target = $region17
  $region16: #{_lambda_.1} parent=0 // pred_region
    _
  $region17: #{_lambda_.1} parent=0 // pred_fallthru
    _
  // Predicated region
  $region18: #{_lambda_.1} parent=0 // pred_check
    _
  $region19: #{_lambda_.1} parent=0 // pred_check_branch
    %30 = sbr.rel (0) target = $region21
  $region20: #{_lambda_.1} parent=0 // pred_region
    _
  $region21: #{_lambda_.1} parent=0 // pred_fallthru
    _
  // Predicated region
  $region22: #{_lambda_.1} parent=0 // pred_check
    _
  $region23: #{_lambda_.1} parent=0 // pred_check_branch
    %32 = sbr.rel (0) target = $region25
  $region24: #{_lambda_.1} parent=0 // pred_region
    _
  $region25: #{_lambda_.1} parent=0 // pred_fallthru
    _
  // Predicated region
  $region26: #{_lambda_.1} parent=0 // pred_check
    _
  $region27: #{_lambda_.1} parent=0 // pred_check_branch
    %34 = sbr.rel (0) target = $region29
  $region28: #{_lambda_.1} parent=0 // pred_region
    _
  $region29: #{_lambda_.1} parent=0 // pred_fallthru
    _
  // Predicated region
  $region30: #{_lambda_.1} parent=0 // pred_check
    _
  $region31: #{_lambda_.1} parent=0 // pred_check_branch
    %36 = sbr.rel (0) target = $region33
  $region32: #{_lambda_.1} parent=0 // pred_region
    _
  $region33: #{_lambda_.1} parent=0 // pred_fallthru
    _
  // Predicated region
  $region34: #{_lambda_.1} parent=0 // pred_check
    _
  $region35: #{_lambda_.1} parent=0 // pred_check_branch
    %38 = sbr.rel (0) target = $region37
  $region36: #{_lambda_.1} parent=0 // pred_region
    _
  $region37: #{_lambda_.1} parent=0 // pred_fallthru
    _
  // Predicated region
  $region38: #{_lambda_.1} parent=0 // pred_check
    _
  $region39: #{_lambda_.1} parent=0 // pred_check_branch
    %40 = sbr.rel (0) target = $region41
  $region40: #{_lambda_.1} parent=0 // pred_region
    _
  $region41: #{_lambda_.1} parent=0 // pred_fallthru
    _
  // Predicated region
  $region42: #{_lambda_.1} parent=0 // pred_check
    _
  $region43: #{_lambda_.1} parent=0 // pred_check_branch
    %42 = sbr.rel (0) target = $region45
  $region44: #{_lambda_.1} parent=0 // pred_region
    _
  $region45: #{_lambda_.1} parent=0 // pred_fallthru
    _
  // Predicated region
  $region46: #{_lambda_.1} parent=0 // pred_check
    _
  $region47: #{_lambda_.1} parent=0 // pred_check_branch
    %44 = sbr.rel (0) target = $region49
  $region48: #{_lambda_.1} parent=0 // pred_region
    _
  $region49: #{_lambda_.1} parent=0 // pred_fallthru
    _
  // Predicated region
  $region50: #{_lambda_.1} parent=0 // pred_check
    _
  $region51: #{_lambda_.1} parent=0 // pred_check_branch
    %46 = sbr.rel (0) target = $region53
  $region52: #{_lambda_.1} parent=0 // pred_region
    _
  $region53: #{_lambda_.1} parent=0 // pred_fallthru
    _
  // Predicated region
  $region54: #{_lambda_.1} parent=0 // pred_check
    _
  $region55: #{_lambda_.1} parent=0 // pred_check_branch
    %48 = sbr.rel (0) target = $region57
  $region56: #{_lambda_.1} parent=0 // pred_region
    _
  $region57: #{_lambda_.1} parent=0 // pred_fallthru
    _
  %v50 = vld [vmem:[%s0] sm:$0xff]
  %v51 = vlaneseq
  %v52 = vand.u32 %v51, 127
  %53 = vset.pattern.permute.xlu0 0
  %54 = vperm.xlu0 %53, %v50
  %v55 = vpop.permute.xlu0 %54
  %vm56 = vcmp.eq.s32.totalorder %v52, %v55
  %v57 = vsel %vm56, 1, 0
  %v58 = vcvt.s32.f32 %v57
  %v59 = vpack.c.bf16 %v58, %v58
  %60 = vset.pattern.permute.xlu0 1
  %61 = vperm.xlu0 %60, %v50
  %v62 = vpop.permute.xlu0 %61
  %vm63 = vcmp.eq.s32.totalorder %v52, %v62
  %v64 = vsel %vm63, 1, 0
  %v65 = vcvt.s32.f32 %v64
  %v66 = vpack.c.bf16 %v65, %v65
  %v67 = vld [vmem:[%s2] sm:$0xf]
  %v68 = vld [vmem:[%s2 + $0x4] sm:$0xf]
  %v71 = vunpack.c.l.b16 %v67
  %v72 = vunpack.c.l.b16 %v68
  %v73 = vpack.c.b16 %v72, %v71
  %vm75 = vcmask 130048
  %v77 = vsel %vm75, %v59, 0
  %79 = vmatprep.subr.bf16.mxu0 0
  %80 = vmatpush1.bf16.msra.mxu0 %v73
  %81 = vmatprep.subr.bf16.mxu0 0
  %82 = vmatpush1.bf16.msra.mxu0 0
  %83 = vmatprep.subr.bf16.mxu0 0
  %84 = vmatpush1.bf16.msra.mxu0 0
  %85 = vmatprep.subr.bf16.mxu0 0
  %86 = vmatpush1.bf16.msra.mxu0 0
  %87 = vmatprep.subr.bf16.mxu0 0
  %88 = vmatpush1.bf16.msra.mxu0 0
  %89 = vmatprep.subr.bf16.mxu0 0
  %90 = vmatpush1.bf16.msra.mxu0 0
  %91 = vmatprep.subr.bf16.mxu0 0
  %92 = vmatpush1.bf16.msra.mxu0 0
  %93 = vmatprep.subr.bf16.mxu0 0
  %94 = vmatpush1.bf16.msra.mxu0 0
  %95 = vmatprep.subr.bf16.mxu0 0
  %96 = vmatpush1.bf16.msra.mxu0 0
  %97 = vmatprep.subr.bf16.mxu0 0
  %98 = vmatpush1.bf16.msra.mxu0 0
  %99 = vmatprep.subr.bf16.mxu0 0
  %100 = vmatpush1.bf16.msra.mxu0 0
  %101 = vmatprep.subr.bf16.mxu0 0
  %102 = vmatpush1.bf16.msra.mxu0 0
  %103 = vmatprep.subr.bf16.mxu0 0
  %104 = vmatpush1.bf16.msra.mxu0 0
  %105 = vmatprep.subr.bf16.mxu0 0
  %106 = vmatpush1.bf16.msra.mxu0 0
  %107 = vmatprep.subr.bf16.mxu0 0
  %108 = vmatpush1.bf16.msra.mxu0 0
  %109 = vmatprep.subr.bf16.mxu0 0
  %110 = vmatpush1.bf16.msra.mxu0 0
  %111 = vmatprep.mubr.bf16.mxu0 0
  %112 = vmatmul.mubr.bf16.gmra.mrb[0].mxu0 %v77
  %v113 = vpop.f32.mrb[0].mxu0
  %v114 = vadd.f32 0.0, %v113
  %v115 = vpop.f32.mrb[0].mxu0
  %v116 = vpop.f32.mrb[0].mxu0
  %v117 = vpop.f32.mrb[0].mxu0
  %118 = vdwg.mxu0
  %v119 = vpack.c.bf16 %v114, %v114
  %v120 = vld [vmem:[%s3] sm:$0xf]
  %v121 = vld [vmem:[%s3 + $0x4] sm:$0xf]
  %v122 = vld [vmem:[%s3 + $0x8] sm:$0xf]
  %v123 = vld [vmem:[%s3 + $0xc] sm:$0xf]
  %v128 = vunpack.c.l.b16 %v120
  %v129 = vunpack.c.l.b16 %v121
  %v130 = vunpack.c.l.b16 %v122
  %v131 = vunpack.c.l.b16 %v123
  %v132 = vpack.c.b16 %v129, %v128
  %v133 = vpack.c.b16 %v131, %v130
  %vm136 = vcmask 261120
  %v138 = vsel %vm136, %v66, 0
  %140 = vmatprep.subr.bf16.mxu0 0
  %141 = vmatpush1.bf16.msra.mxu0 %v132
  %142 = vmatprep.subr.bf16.mxu0 0
  %143 = vmatpush1.bf16.msra.mxu0 %v133
  %144 = vmatprep.subr.bf16.mxu0 0
  %145 = vmatpush1.bf16.msra.mxu0 0
  %146 = vmatprep.subr.bf16.mxu0 0
  %147 = vmatpush1.bf16.msra.mxu0 0
  %148 = vmatprep.subr.bf16.mxu0 0
  %149 = vmatpush1.bf16.msra.mxu0 0
  %150 = vmatprep.subr.bf16.mxu0 0
  %151 = vmatpush1.bf16.msra.mxu0 0
  %152 = vmatprep.subr.bf16.mxu0 0
  %153 = vmatpush1.bf16.msra.mxu0 0
  %154 = vmatprep.subr.bf16.mxu0 0
  %155 = vmatpush1.bf16.msra.mxu0 0
  %156 = vmatprep.subr.bf16.mxu0 0
  %157 = vmatpush1.bf16.msra.mxu0 0
  %158 = vmatprep.subr.bf16.mxu0 0
  %159 = vmatpush1.bf16.msra.mxu0 0
  %160 = vmatprep.subr.bf16.mxu0 0
  %161 = vmatpush1.bf16.msra.mxu0 0
  %162 = vmatprep.subr.bf16.mxu0 0
  %163 = vmatpush1.bf16.msra.mxu0 0
  %164 = vmatprep.subr.bf16.mxu0 0
  %165 = vmatpush1.bf16.msra.mxu0 0
  %166 = vmatprep.subr.bf16.mxu0 0
  %167 = vmatpush1.bf16.msra.mxu0 0
  %168 = vmatprep.subr.bf16.mxu0 0
  %169 = vmatpush1.bf16.msra.mxu0 0
  %170 = vmatprep.subr.bf16.mxu0 0
  %171 = vmatpush1.bf16.msra.mxu0 0
  %172 = vmatprep.mubr.bf16.mxu0 0
  %173 = vmatmul.mubr.bf16.gmra.mrb[0].mxu0 %v138
  %v174 = vpop.f32.mrb[0].mxu0
  %v175 = vadd.f32 0.0, %v174
  %v176 = vpop.f32.mrb[0].mxu0
  %v177 = vpop.f32.mrb[0].mxu0
  %v178 = vpop.f32.mrb[0].mxu0
  %179 = vdwg.mxu0
  %v180 = vpack.c.bf16 %v175, %v175
  %v181 = vld [vmem:[%s1] sm:$0xff]
  %v182 = vpack.c.bf16 %v181, %v181
  %v183 = vld [vmem:[%s4] sm:$0xf]
  %v184 = vld [vmem:[%s4 + $0x4] sm:$0xf]
  %v185 = vld [vmem:[%s4 + $0x8] sm:$0x1]
  %v186 = vld [vmem:[%s5] sm:$0x1]
  %v188 = vlaneseq
  %v189 = vshrl.u32 %v188, 7
  %v190 = vsub.s32 0, %v189
  %v191 = vrot.slane %v186, %v190
  %v196 = vunpack.c.l.b16 %v183
  %v197 = vunpack.c.l.b16 %v184
  %v198 = vunpack.c.l.b16 %v185
  %v199 = vpack.c.b16 %v197, %v196
  %v200 = vpack.c.b16 %v198, %v198
  %vm202 = vcmask 146432
  %v204 = vsel %vm202, %v182, 0
  %vm206 = vcmask 1040384
  %v208 = vsel %vm206, %v200, 0
  %210 = vmatprep.subr.bf16.mxu0 0
  %211 = vmatpush1.bf16.msra.mxu0 %v199
  %212 = vmatprep.subr.bf16.mxu0 0
  %213 = vmatpush1.bf16.msra.mxu0 %v208
  %214 = vmatprep.subr.bf16.mxu0 0
  %215 = vmatpush1.bf16.msra.mxu0 0
  %216 = vmatprep.subr.bf16.mxu0 0
  %217 = vmatpush1.bf16.msra.mxu0 0
  %218 = vmatprep.subr.bf16.mxu0 0
  %219 = vmatpush1.bf16.msra.mxu0 0
  %220 = vmatprep.subr.bf16.mxu0 0
  %221 = vmatpush1.bf16.msra.mxu0 0
  %222 = vmatprep.subr.bf16.mxu0 0
  %223 = vmatpush1.bf16.msra.mxu0 0
  %224 = vmatprep.subr.bf16.mxu0 0
  %225 = vmatpush1.bf16.msra.mxu0 0
  %226 = vmatprep.subr.bf16.mxu0 0
  %227 = vmatpush1.bf16.msra.mxu0 0
  %228 = vmatprep.subr.bf16.mxu0 0
  %229 = vmatpush1.bf16.msra.mxu0 0
  %230 = vmatprep.subr.bf16.mxu0 0
  %231 = vmatpush1.bf16.msra.mxu0 0
  %232 = vmatprep.subr.bf16.mxu0 0
  %233 = vmatpush1.bf16.msra.mxu0 0
  %234 = vmatprep.subr.bf16.mxu0 0
  %235 = vmatpush1.bf16.msra.mxu0 0
  %236 = vmatprep.subr.bf16.mxu0 0
  %237 = vmatpush1.bf16.msra.mxu0 0
  %238 = vmatprep.subr.bf16.mxu0 0
  %239 = vmatpush1.bf16.msra.mxu0 0
  %240 = vmatprep.subr.bf16.mxu0 0
  %241 = vmatpush1.bf16.msra.mxu0 0
  %242 = vmatprep.mubr.bf16.mxu0 0
  %243 = vmatmul.mubr.bf16.gmra.mrb[0].mxu0 %v204
  %v244 = vpop.f32.mrb[0].mxu0
  %v245 = vadd.f32 %v191, %v244
  %v246 = vpop.f32.mrb[0].mxu0
  %v247 = vpop.f32.mrb[0].mxu0
  %v248 = vpop.f32.mrb[0].mxu0
  %249 = vdwg.mxu0
  %v250 = vmax.f32 %v245, 0.0
  %v251 = vld [vmem:[%s6] sm:$0xf]
  %v252 = vld [vmem:[%s6 + $0x4] sm:$0xf]
  %v253 = vld [vmem:[%s6 + $0x8] sm:$0xf]
  %v254 = vld [vmem:[%s6 + $0xc] sm:$0xf]
  %v255 = vld [vmem:[%s7] sm:$0xf]
  %v256 = vld [vmem:[%s7 + $0x4] sm:$0xf]
  %v257 = vld [vmem:[%s7 + $0x8] sm:$0xf]
  %v258 = vld [vmem:[%s7 + $0xc] sm:$0xf]
  %v263 = vunpack.c.l.b16 %v255
  %v264 = vunpack.c.l.b16 %v256
  %v265 = vunpack.c.l.b16 %v257
  %v266 = vunpack.c.l.b16 %v258
  %v267 = vpack.c.b16 %v264, %v263
  %v268 = vpack.c.b16 %v266, %v265
  %v272 = vsel %vm136, %v180, 0
  %274 = vmatprep.subr.bf16.mxu0 0
  %275 = vmatpush1.bf16.msra.mxu0 %v267
  %276 = vmatprep.subr.bf16.mxu0 0
  %277 = vmatpush1.bf16.msra.mxu0 %v268
  %278 = vmatprep.subr.bf16.mxu0 0
  %279 = vmatpush1.bf16.msra.mxu0 0
  %280 = vmatprep.subr.bf16.mxu0 0
  %281 = vmatpush1.bf16.msra.mxu0 0
  %282 = vmatprep.subr.bf16.mxu0 0
  %283 = vmatpush1.bf16.msra.mxu0 0
  %284 = vmatprep.subr.bf16.mxu0 0
  %285 = vmatpush1.bf16.msra.mxu0 0
  %286 = vmatprep.subr.bf16.mxu0 0
  %287 = vmatpush1.bf16.msra.mxu0 0
  %288 = vmatprep.subr.bf16.mxu0 0
  %289 = vmatpush1.bf16.msra.mxu0 0
  %290 = vmatprep.subr.bf16.mxu0 0
  %291 = vmatpush1.bf16.msra.mxu0 0
  %292 = vmatprep.subr.bf16.mxu0 0
  %293 = vmatpush1.bf16.msra.mxu0 0
  %294 = vmatprep.subr.bf16.mxu0 0
  %295 = vmatpush1.bf16.msra.mxu0 0
  %296 = vmatprep.subr.bf16.mxu0 0
  %297 = vmatpush1.bf16.msra.mxu0 0
  %298 = vmatprep.subr.bf16.mxu0 0
  %299 = vmatpush1.bf16.msra.mxu0 0
  %300 = vmatprep.subr.bf16.mxu0 0
  %301 = vmatpush1.bf16.msra.mxu0 0
  %302 = vmatprep.subr.bf16.mxu0 0
  %303 = vmatpush1.bf16.msra.mxu0 0
  %304 = vmatprep.subr.bf16.mxu0 0
  %305 = vmatpush1.bf16.msra.mxu0 0
  %306 = vmatprep.mubr.bf16.mxu0 0
  %307 = vmatmul.mubr.bf16.gmra.mrb[0].mxu0 %v272
  %v308 = vpop.f32.mrb[0].mxu0
  %v309 = vadd.f32 0.0, %v308
  %v310 = vpop.f32.mrb[0].mxu0
  %v311 = vpop.f32.mrb[0].mxu0
  %v312 = vpop.f32.mrb[0].mxu0
  %313 = vdwg.mxu0
  %v318 = vunpack.c.l.b16 %v251
  %v319 = vunpack.c.l.b16 %v252
  %v320 = vunpack.c.l.b16 %v253
  %v321 = vunpack.c.l.b16 %v254
  %v322 = vpack.c.b16 %v319, %v318
  %v323 = vpack.c.b16 %v321, %v320
  %v327 = vsel %vm136, %v119, 0
  %329 = vmatprep.subr.bf16.mxu0 0
  %330 = vmatpush1.bf16.msra.mxu0 %v322
  %331 = vmatprep.subr.bf16.mxu0 0
  %332 = vmatpush1.bf16.msra.mxu0 %v323
  %333 = vmatprep.subr.bf16.mxu0 0
  %334 = vmatpush1.bf16.msra.mxu0 0
  %335 = vmatprep.subr.bf16.mxu0 0
  %336 = vmatpush1.bf16.msra.mxu0 0
  %337 = vmatprep.subr.bf16.mxu0 0
  %338 = vmatpush1.bf16.msra.mxu0 0
  %339 = vmatprep.subr.bf16.mxu0 0
  %340 = vmatpush1.bf16.msra.mxu0 0
  %341 = vmatprep.subr.bf16.mxu0 0
  %342 = vmatpush1.bf16.msra.mxu0 0
  %343 = vmatprep.subr.bf16.mxu0 0
  %344 = vmatpush1.bf16.msra.mxu0 0
  %345 = vmatprep.subr.bf16.mxu0 0
  %346 = vmatpush1.bf16.msra.mxu0 0
  %347 = vmatprep.subr.bf16.mxu0 0
  %348 = vmatpush1.bf16.msra.mxu0 0
  %349 = vmatprep.subr.bf16.mxu0 0
  %350 = vmatpush1.bf16.msra.mxu0 0
  %351 = vmatprep.subr.bf16.mxu0 0
  %352 = vmatpush1.bf16.msra.mxu0 0
  %353 = vmatprep.subr.bf16.mxu0 0
  %354 = vmatpush1.bf16.msra.mxu0 0
  %355 = vmatprep.subr.bf16.mxu0 0
  %356 = vmatpush1.bf16.msra.mxu0 0
  %357 = vmatprep.subr.bf16.mxu0 0
  %358 = vmatpush1.bf16.msra.mxu0 0
  %359 = vmatprep.subr.bf16.mxu0 0
  %360 = vmatpush1.bf16.msra.mxu0 0
  %361 = vmatprep.mubr.bf16.mxu0 0
  %362 = vmatmul.mubr.bf16.gmra.mrb[0].mxu0 %v327
  %v363 = vpop.f32.mrb[0].mxu0
  %v364 = vadd.f32 %v309, %v363
  %v365 = vpop.f32.mrb[0].mxu0
  %v366 = vpop.f32.mrb[0].mxu0
  %v367 = vpop.f32.mrb[0].mxu0
  %368 = vdwg.mxu0
  %v369 = vpack.c.bf16 %v250, %v250
  %v370 = vld [vmem:[%s8] sm:$0xf]
  %v371 = vld [vmem:[%s8 + $0x4] sm:$0xf]
  %v372 = vld [vmem:[%s8 + $0x8] sm:$0xf]
  %v373 = vld [vmem:[%s8 + $0xc] sm:$0xf]
  %v378 = vunpack.c.l.b16 %v370
  %v379 = vunpack.c.l.b16 %v371
  %v380 = vunpack.c.l.b16 %v372
  %v381 = vunpack.c.l.b16 %v373
  %v382 = vpack.c.b16 %v379, %v378
  %v383 = vpack.c.b16 %v381, %v380
  %v387 = vsel %vm136, %v369, 0
  %389 = vmatprep.subr.bf16.mxu0 0
  %390 = vmatpush1.bf16.msra.mxu0 %v382
  %391 = vmatprep.subr.bf16.mxu0 0
  %392 = vmatpush1.bf16.msra.mxu0 %v383
  %393 = vmatprep.subr.bf16.mxu0 0
  %394 = vmatpush1.bf16.msra.mxu0 0
  %395 = vmatprep.subr.bf16.mxu0 0
  %396 = vmatpush1.bf16.msra.mxu0 0
  %397 = vmatprep.subr.bf16.mxu0 0
  %398 = vmatpush1.bf16.msra.mxu0 0
  %399 = vmatprep.subr.bf16.mxu0 0
  %400 = vmatpush1.bf16.msra.mxu0 0
  %401 = vmatprep.subr.bf16.mxu0 0
  %402 = vmatpush1.bf16.msra.mxu0 0
  %403 = vmatprep.subr.bf16.mxu0 0
  %404 = vmatpush1.bf16.msra.mxu0 0
  %405 = vmatprep.subr.bf16.mxu0 0
  %406 = vmatpush1.bf16.msra.mxu0 0
  %407 = vmatprep.subr.bf16.mxu0 0
  %408 = vmatpush1.bf16.msra.mxu0 0
  %409 = vmatprep.subr.bf16.mxu0 0
  %410 = vmatpush1.bf16.msra.mxu0 0
  %411 = vmatprep.subr.bf16.mxu0 0
  %412 = vmatpush1.bf16.msra.mxu0 0
  %413 = vmatprep.subr.bf16.mxu0 0
  %414 = vmatpush1.bf16.msra.mxu0 0
  %415 = vmatprep.subr.bf16.mxu0 0
  %416 = vmatpush1.bf16.msra.mxu0 0
  %417 = vmatprep.subr.bf16.mxu0 0
  %418 = vmatpush1.bf16.msra.mxu0 0
  %419 = vmatprep.subr.bf16.mxu0 0
  %420 = vmatpush1.bf16.msra.mxu0 0
  %421 = vmatprep.mubr.bf16.mxu0 0
  %422 = vmatmul.mubr.bf16.gmra.mrb[0].mxu0 %v387
  %v423 = vpop.f32.mrb[0].mxu0
  %v424 = vadd.f32 0.0, %v423
  %v425 = vpop.f32.mrb[0].mxu0
  %v426 = vpop.f32.mrb[0].mxu0
  %v427 = vpop.f32.mrb[0].mxu0
  %428 = vdwg.mxu0
  %v429 = vadd.f32 %v364, %v424
  %v430 = vld [vmem:[%s9] sm:$0x1]
  %v432 = vlaneseq
  %v433 = vshrl.u32 %v432, 7
  %v434 = vsub.s32 0, %v433
  %v435 = vrot.slane %v430, %v434
  %v437 = vadd.f32 %v429, %v435
  %v438 = vmax.f32 %v437, 0.0
  %v439 = vpack.c.bf16 %v438, %v438
  %v440 = vld [vmem:[%s10] sm:$0xf]
  %v441 = vld [vmem:[%s10 + $0x4] sm:$0xf]
  %v442 = vld [vmem:[%s10 + $0x8] sm:$0xf]
  %v443 = vld [vmem:[%s10 + $0xc] sm:$0xf]
  %v444 = vld [vmem:[%s10 + $0x10] sm:$0xf]
  %v445 = vld [vmem:[%s10 + $0x14] sm:$0xf]
  %v446 = vld [vmem:[%s10 + $0x18] sm:$0xf]
  %v447 = vld [vmem:[%s10 + $0x1c] sm:$0xf]
  %v448 = vld [vmem:[%s11] sm:$0x1]
  %v450 = vlaneseq
  %v451 = vshrl.u32 %v450, 7
  %v452 = vsub.s32 0, %v451
  %v453 = vrot.slane %v448, %v452
  %v463 = vunpack.c.l.b16 %v440
  %v464 = vunpack.c.l.b16 %v441
  %v465 = vunpack.c.l.b16 %v442
  %v466 = vunpack.c.l.b16 %v443
  %v467 = vunpack.c.l.b16 %v444
  %v468 = vunpack.c.l.b16 %v445
  %v469 = vunpack.c.l.b16 %v446
  %v470 = vunpack.c.l.b16 %v447
  %v471 = vpack.c.b16 %v464, %v463
  %v472 = vpack.c.b16 %v466, %v465
  %v473 = vpack.c.b16 %v468, %v467
  %v474 = vpack.c.b16 %v470, %v469
  %vm479 = vcmask 523264
  %v481 = vsel %vm479, %v439, 0
  %483 = vmatprep.subr.bf16.mxu0 0
  %484 = vmatpush1.bf16.msra.mxu0 %v471
  %485 = vmatprep.subr.bf16.mxu0 0
  %486 = vmatpush1.bf16.msra.mxu0 %v472
  %487 = vmatprep.subr.bf16.mxu0 0
  %488 = vmatpush1.bf16.msra.mxu0 %v473
  %489 = vmatprep.subr.bf16.mxu0 0
  %490 = vmatpush1.bf16.msra.mxu0 %v474
  %491 = vmatprep.subr.bf16.mxu0 0
  %492 = vmatpush1.bf16.msra.mxu0 0
  %493 = vmatprep.subr.bf16.mxu0 0
  %494 = vmatpush1.bf16.msra.mxu0 0
  %495 = vmatprep.subr.bf16.mxu0 0
  %496 = vmatpush1.bf16.msra.mxu0 0
  %497 = vmatprep.subr.bf16.mxu0 0
  %498 = vmatpush1.bf16.msra.mxu0 0
  %499 = vmatprep.subr.bf16.mxu0 0
  %500 = vmatpush1.bf16.msra.mxu0 0
  %501 = vmatprep.subr.bf16.mxu0 0
  %502 = vmatpush1.bf16.msra.mxu0 0
  %503 = vmatprep.subr.bf16.mxu0 0
  %504 = vmatpush1.bf16.msra.mxu0 0
  %505 = vmatprep.subr.bf16.mxu0 0
  %506 = vmatpush1.bf16.msra.mxu0 0
  %507 = vmatprep.subr.bf16.mxu0 0
  %508 = vmatpush1.bf16.msra.mxu0 0
  %509 = vmatprep.subr.bf16.mxu0 0
  %510 = vmatpush1.bf16.msra.mxu0 0
  %511 = vmatprep.subr.bf16.mxu0 0
  %512 = vmatpush1.bf16.msra.mxu0 0
  %513 = vmatprep.subr.bf16.mxu0 0
  %514 = vmatpush1.bf16.msra.mxu0 0
  %515 = vmatprep.mubr.bf16.mxu0 0
  %516 = vmatmul.mubr.bf16.gmra.mrb[0].mxu0 %v481
  %v517 = vpop.f32.mrb[0].mxu0
  %v518 = vadd.f32 %v453, %v517
  %v519 = vpop.f32.mrb[0].mxu0
  %v520 = vpop.f32.mrb[0].mxu0
  %v521 = vpop.f32.mrb[0].mxu0
  %522 = vdwg.mxu0
  %v523 = vmax.f32 %v518, 0.0
  %v524 = vld [vmem:[%s12] sm:$0x1]
  %v526 = vlaneseq
  %v527 = vshrl.u32 %v526, 7
  %v528 = vsub.s32 0, %v527
  %v529 = vrot.slane %v524, %v528
  %v531 = vmul.f32 %v523, %v529
  %v532 = vsel %vm136, %v531, 0.0
  %533 = vadd.xlane.f32.xlu0 %v532
  %v534 = vpop.xlane.xlu0 %533
  %v535 = vld [vmem:[#allocation2] sm:$0x1]
  %v537 = vlaneseq
  %v538 = vshrl.u32 %v537, 7
  %v539 = vsub.s32 0, %v538
  %v540 = vrot.slane %v535, %v539
  %v542 = vadd.f32 %v534, %v540
  %vm543 = vcmask 7168
  %544 = vst.msk [vmem:[%s14] sm:$0xff] %vm543, %v542
  // Predicated region
  $region58: #{_lambda_.1} parent=0 // pred_check
    _
  $region59: #{_lambda_.1} parent=0 // pred_check_branch
    %546 = sbr.rel (0) target = $region61
  $region60: #{_lambda_.1} parent=0 // pred_region
    _
  $region61: #{_lambda_.1} parent=0 // pred_fallthru
    _
  // Predicated region
  $region62: #{_lambda_.1} parent=0 // pred_check
    _
  $region63: #{_lambda_.1} parent=0 // pred_check_branch
    %548 = sbr.rel (0) target = $region65
  $region64: #{_lambda_.1} parent=0 // pred_region
    _
  $region65: #{_lambda_.1} parent=0 // pred_fallthru
    _

</llo_original>
